<compile_context>
chip_gen: v7x
topology: tpu7x:2x2x1
jax: 0.10.0
libtpu: 0.0.40
codegen_flags: <defaults>
</compile_context>

<pallas_src>
import functools

import jax
import jax.numpy as jnp
from jax.experimental import pallas as pl
from jax.experimental.pallas import tpu as pltpu

OVERFLOW_MARGIN = 1e-08
LANE = 128
SUBLANE = 8
VMEM_BUDGET = 24 << 20  # bytes; headroom under the 32 MiB scoped default


def _round_up(x, m):
    return ((x + m - 1) // m) * m


def _vmem_bytes(tm, tk, out_pad, ce):
    """Estimated VMEM working set (double-buffered inputs/outputs + scratch)."""
    return (2 * tm * tk * ce            # adjacency tile
            + 2 * tk * out_pad * ce     # scaled_fc tile
            + 2 * tm * out_pad * 4      # output tile (f32)
            + tm * out_pad * 4          # f32 accumulator scratch
            + 2 * tm * 4)               # row-scale tile


def _fit_tiles(tm, tk, out_pad, ce):
    """Shrink (tm, tk) until the working set fits the VMEM budget."""
    while _vmem_bytes(tm, tk, out_pad, ce) > VMEM_BUDGET and tm > 256:
        tm = max(256, _round_up(tm // 2, SUBLANE))
    while _vmem_bytes(tm, tk, out_pad, ce) > VMEM_BUDGET and tk > LANE:
        tk = max(LANE, _round_up(tk // 2, LANE))
    return tm, tk


def _gcn_matmul_kernel(adj_ref, sfc_ref, s_ref, out_ref, acc_ref):
    """out[i, :] = s[i] * sum_k adj[i, k] @ sfc[k, :], tiled over (row, k)."""
    k = pl.program_id(1)

    @pl.when(k == 0)
    def _():
        acc_ref[...] = jnp.zeros_like(acc_ref)

    # MXU matmul (bf16 or f32 inputs), always accumulating in f32.
    acc_ref[...] += jnp.dot(adj_ref[...], sfc_ref[...],
                            preferred_element_type=jnp.float32)

    @pl.when(k == pl.num_programs(1) - 1)
    def _():
        # Final row scale rides the VPU epilogue (free while DMA/MXU bound).
        out_ref[...] = (s_ref[...] * acc_ref[...]).astype(out_ref.dtype)


@functools.partial(jax.jit, static_argnames=("compute_dtype", "tm", "tk"))
def gcn_layer(values, adjacency, weight, bias, *,
              compute_dtype=jnp.bfloat16, tm=1024, tk=512):
    """values: (N, in_dim), adjacency: (N, N), weight: (out_dim, in_dim),
    bias: (out_dim,). Returns (N, out_dim) float32."""
    n, _ = values.shape
    out_dim = weight.shape[0]

    values = values.astype(jnp.float32)
    adjacency = adjacency.astype(jnp.float32)

    # ---- Phase 1 (plain XLA, done exactly once, all f32) -------------------
    d = jnp.sum(adjacency, axis=1, keepdims=True)            # (N, 1), f32 accum
    s = jax.lax.rsqrt(d + OVERFLOW_MARGIN)                    # (N, 1)
    fc = values @ weight.astype(jnp.float32).T + bias.astype(jnp.float32)[None, :]
    sfc = s * fc                                              # (N, out_dim)

    # ---- Choose tiles & pad to TPU-friendly shapes --------------------------
    out_pad = _round_up(out_dim, LANE)                        # lane-dense output
    ce = jnp.dtype(compute_dtype).itemsize
    tm = min(tm, _round_up(n, SUBLANE))
    tk = min(tk, _round_up(n, LANE))
    tm, tk = _fit_tiles(tm, tk, out_pad, ce)
    n_rows = _round_up(n, tm)                                 # output-row dim
    n_cols = _round_up(n, tk)                                 # reduction dim

    # Zero padding is an exact no-op in the matmul; skip copies when aligned.
    if (n_rows, n_cols) == (n, n):
        adj_p = adjacency.astype(compute_dtype)
    else:
        adj_p = jnp.zeros((n_rows, n_cols), compute_dtype).at[:n, :n].set(
            adjacency.astype(compute_dtype))
    if (n_cols, out_pad) == (n, out_dim):
        sfc_p = sfc.astype(compute_dtype)
    else:
        sfc_p = jnp.zeros((n_cols, out_pad), compute_dtype).at[:n, :out_dim].set(
            sfc.astype(compute_dtype))
    if n_rows == n:
        s_p = s
    else:
        s_p = jnp.zeros((n_rows, 1), jnp.float32).at[:n, :].set(s)

    grid = (n_rows // tm, n_cols // tk)

    out_padded = pl.pallas_call(
        _gcn_matmul_kernel,
        out_shape=jax.ShapeDtypeStruct((n_rows, out_pad), jnp.float32),
        grid_spec=pltpu.PrefetchScalarGridSpec(
            num_scalar_prefetch=0,
            grid=grid,
            in_specs=[
                pl.BlockSpec((tm, tk), lambda i, k: (i, k)),        # adjacency
                pl.BlockSpec((tk, out_pad), lambda i, k: (k, 0)),   # scaled_fc
                pl.BlockSpec((tm, 1), lambda i, k: (i, 0)),         # row scale
            ],
            out_specs=pl.BlockSpec((tm, out_pad), lambda i, k: (i, 0)),
            scratch_shapes=[pltpu.VMEM((tm, out_pad), jnp.float32)],
        ),
        compiler_params=pltpu.CompilerParams(
            dimension_semantics=("parallel", "arbitrary")),
        cost_estimate=pl.CostEstimate(
            flops=2 * n_rows * n_cols * out_pad,
            transcendentals=0,
            bytes_accessed=(n_rows * n_cols * ce                     # A once
                            + grid[0] * n_cols * out_pad * ce        # sfc re-reads
                            + n_rows * out_pad * 4                   # output
                            + grid[1] * n_rows * 4),                 # row scale
        ),
    )(adj_p, sfc_p, s_p)

    return out_padded[:n, :out_dim]


def gcn_layer_ref(values, adjacency, weight, bias):
    """Pure-JAX reference mirroring the PyTorch module line by line."""
    fc_sc = values @ weight.T + bias
    n = adjacency.shape[0]
    d = adjacency @ jnp.ones((n, 1), dtype=adjacency.dtype)
    d_inv_sqrt = jnp.power(d + OVERFLOW_MARGIN, -0.5)
    d_inv_sqrt = jnp.eye(n, dtype=adjacency.dtype) * d_inv_sqrt
    laplacian = d_inv_sqrt @ adjacency @ d_inv_sqrt
    return laplacian @ fc_sc


if __name__ == "__main__":
    # Small shapes: N=8 nodes, in_dim=32, out_dim=32.
    N, IN_DIM, OUT_DIM = 8, 32, 32
    key = jax.random.PRNGKey(0)
    k_v, k_a, k_w, k_b = jax.random.split(key, 4)

    values = jax.random.normal(k_v, (N, IN_DIM), dtype=jnp.float32)
    # Symmetric non-negative adjacency (typical GCN input).
    a_raw = jax.random.uniform(k_a, (N, N), dtype=jnp.float32)
    adjacency = 0.5 * (a_raw + a_raw.T)

    # Deterministic nn.Linear-style init: U(-1/sqrt(in_dim), 1/sqrt(in_dim)).
    bound = 1.0 / float(IN_DIM) ** 0.5
    weight = jax.random.uniform(k_w, (OUT_DIM, IN_DIM), jnp.float32, -bound, bound)
    bias = jax.random.uniform(k_b, (OUT_DIM,), jnp.float32, -bound, bound)

    ref = gcn_layer_ref(values, adjacency, weight, bias)

    # Exact path (f32 on the MXU) — matches the PyTorch semantics tightly.
    out_f32 = gcn_layer(values, adjacency, weight, bias,
                        compute_dtype=jnp.float32)
    jax.block_until_ready(out_f32)
    assert out_f32.shape == (N, OUT_DIM)
    assert jnp.allclose(out_f32, ref, atol=1e-5, rtol=1e-5)

    # Default fast path: bf16 adjacency / scaled_fc, f32 accumulation.
    out = gcn_layer(values, adjacency, weight, bias)
    jax.block_until_ready(out)
    assert out.shape == (N, OUT_DIM)
    assert jnp.allclose(out, ref, atol=3e-2, rtol=3e-2)

    print("KERNEL_OK")
</pallas_src>

<mosaic_0001>
module attributes {stable_mosaic.version = 11 : i64} {
  func.func @_gcn_matmul_kernel(%arg0: i32, %arg1: i32, %arg2: memref<8x128xf32, #tpu.memory_space<vmem>>, %arg3: memref<128x128xf32, #tpu.memory_space<vmem>>, %arg4: memref<8x1xf32, #tpu.memory_space<vmem>>, %arg5: memref<8x128xf32, #tpu.memory_space<vmem>>, %arg6: memref<8x128xf32, #tpu.memory_space<vmem>>) attributes {dimension_semantics = [#tpu.dimension_semantics<parallel>, #tpu.dimension_semantics<arbitrary>], iteration_bounds = array<i64: 1, 1>, scalar_prefetch = 0 : i64, scratch_operands = 1 : i64, tpu.core_type = #tpu.core_type<tc>, window_params = [{transform_indices = @transform_0, window_bounds = array<i64: 8, 128>}, {transform_indices = @transform_1, window_bounds = array<i64: 128, 128>}, {transform_indices = @transform_2, window_bounds = array<i64: 8, 1>}, {transform_indices = @transform_3, window_bounds = array<i64: 8, 128>}]} {
    %c0_i32 = arith.constant 0 : i32
    %0 = arith.cmpi eq, %arg1, %c0_i32 : i32
    %1 = arith.extui %0 : i1 to i32
    %c0_i32_0 = arith.constant 0 : i32
    %2 = arith.cmpi ne, %1, %c0_i32_0 : i32
    scf.if %2 {
      %cst_10 = arith.constant 0.000000e+00 : f32
      %12 = vector.broadcast %cst_10 : f32 to vector<8x128xf32>
      %c0_11 = arith.constant 0 : index
      %c0_12 = arith.constant 0 : index
      %13 = vector.load %arg6[%c0_11, %c0_12] : memref<8x128xf32, #tpu.memory_space<vmem>>, vector<8x128xf32>
      tpu.vector_store %arg6[%c0_11, %c0_12], %12 {strides = array<i32>} : memref<8x128xf32, #tpu.memory_space<vmem>>, vector<8x128xf32>,
    } else {
    }
    %c0 = arith.constant 0 : index
    %c0_1 = arith.constant 0 : index
    %3 = vector.load %arg6[%c0, %c0_1] : memref<8x128xf32, #tpu.memory_space<vmem>>, vector<8x128xf32>
    %c0_2 = arith.constant 0 : index
    %c0_3 = arith.constant 0 : index
    %4 = vector.load %arg2[%c0_2, %c0_3] : memref<8x128xf32, #tpu.memory_space<vmem>>, vector<8x128xf32>
    %c0_4 = arith.constant 0 : index
    %c0_5 = arith.constant 0 : index
    %5 = vector.load %arg3[%c0_4, %c0_5] : memref<128x128xf32, #tpu.memory_space<vmem>>, vector<128x128xf32>
    %cst = arith.constant dense<0.000000e+00> : vector<8x128xf32>
    %6 = tpu.matmul %4, %5, %cst {dimension_numbers = #tpu.dot_dimension_numbers<[1], [0], [0], [1], [0, 0, 1, 1], [], []>} : vector<8x128xf32>, vector<128x128xf32>, vector<8x128xf32> -> vector<8x128xf32>
    %7 = arith.addf %3, %6 : vector<8x128xf32>
    %c0_6 = arith.constant 0 : index
    %c0_7 = arith.constant 0 : index
    %8 = vector.load %arg6[%c0_6, %c0_7] : memref<8x128xf32, #tpu.memory_space<vmem>>, vector<8x128xf32>
    tpu.vector_store %arg6[%c0_6, %c0_7], %7 {strides = array<i32>} : memref<8x128xf32, #tpu.memory_space<vmem>>, vector<8x128xf32>,
    %c0_i32_8 = arith.constant 0 : i32
    %9 = arith.cmpi eq, %arg1, %c0_i32_8 : i32
    %10 = arith.extui %9 : i1 to i32
    %c0_i32_9 = arith.constant 0 : i32
    %11 = arith.cmpi ne, %10, %c0_i32_9 : i32
    scf.if %11 {
      %c0_10 = arith.constant 0 : index
      %c0_11 = arith.constant 0 : index
      %12 = vector.load %arg4[%c0_10, %c0_11] : memref<8x1xf32, #tpu.memory_space<vmem>>, vector<8x1xf32>
      %c0_12 = arith.constant 0 : index
      %c0_13 = arith.constant 0 : index
      %13 = vector.load %arg6[%c0_12, %c0_13] : memref<8x128xf32, #tpu.memory_space<vmem>>, vector<8x128xf32>
      %14 = vector.broadcast %12 : vector<8x1xf32> to vector<8x128xf32>
      %15 = arith.mulf %14, %13 : vector<8x128xf32>
      %c0_14 = arith.constant 0 : index
      %c0_15 = arith.constant 0 : index
      %16 = vector.load %arg5[%c0_14, %c0_15] : memref<8x128xf32, #tpu.memory_space<vmem>>, vector<8x128xf32>
      tpu.vector_store %arg5[%c0_14, %c0_15], %15 {strides = array<i32>} : memref<8x128xf32, #tpu.memory_space<vmem>>, vector<8x128xf32>,
    } else {
    }
    return
  }
  func.func @transform_0(%arg0: i32, %arg1: i32) -> (i32, i32) {
    %c0_i32 = arith.constant 0 : i32
    return %arg0, %arg1 : i32, i32
  }
  func.func @transform_1(%arg0: i32, %arg1: i32) -> (i32, i32) {
    %c0_i32 = arith.constant 0 : i32
    %c0_i32_0 = arith.constant 0 : i32
    return %arg1, %c0_i32 : i32, i32
  }
  func.func @transform_2(%arg0: i32, %arg1: i32) -> (i32, i32) {
    %c0_i32 = arith.constant 0 : i32
    %c0_i32_0 = arith.constant 0 : i32
    return %arg0, %c0_i32 : i32, i32
  }
  func.func @transform_3(%arg0: i32, %arg1: i32) -> (i32, i32) {
    %c0_i32 = arith.constant 0 : i32
    %c0_i32_0 = arith.constant 0 : i32
    return %arg0, %c0_i32 : i32, i32
  }
}

</mosaic_0001>

<llo_original>
// kernel: gcn_layer.1
$region0: #{gcn_layer.1}
  #allocation0 [shape = 'u32[]', space=smem, size = 0x4, offset = 0x4, fixed_abs, tag = 'smem constant byte address 0x4 - core index']
  #allocation1 [shape = 'u32[144,128]{1,0:T(1,128)}', space=vmem, size = 0x12000, scoped, tag = 'internal scratch']
  #allocation2 [shape = 'f32[8,128]{1,0:T(8,128)}', space=vmem, size = 0x1000, scoped, tag = 'scratch operand']
  %s0 = inlined_call_operand.vmem [shape: f32[8,128], index: 0, kind: input, shape index: {}]
  %s1 = inlined_call_operand.vmem [shape: f32[128,128], index: 1, kind: input, shape index: {}]
  %s2 = inlined_call_operand.vmem [shape: f32[8,1], index: 2, kind: input, shape index: {}]
  %s3 = inlined_call_operand.hbm [shape: f32[8,128], index: 3, kind: output, shape index: {}]
  %s4 = sld [smem:[#allocation0]]
  $region30: #{gcn_layer.1} parent=0
    _
  %s6 = ssub.s32 1, %s4
  %s7 = scalar_select 0, %s6, %s4
  $region1: #{gcn_layer.1} parent=0
    #allocation3 [shape = 'u8[4096]{0}', space=vmem, size = 0x1000, scoped, tag = 'output window, operand 0, single buffered']
    #allocation4 [shape = 's32[1]{0}', space=sflag, size = 0x4, scoped, tag = 'scoped memory for gcn_layer.1']
    %8 = vsyncpa [#allocation4], 0
    // Predicated region
    $region2: #{gcn_layer.1} parent=1 // pred_check
      _
    $region3: #{gcn_layer.1} parent=1 // pred_check_branch
      %10 = sbr.rel (0) target = $region5
    $region4: #{gcn_layer.1} parent=1 // pred_region
      _
    $region5: #{gcn_layer.1} parent=1 // pred_fallthru
      _
    // Predicated region
    $region6: #{gcn_layer.1} parent=1 // pred_check
      _
    $region7: #{gcn_layer.1} parent=1 // pred_check_branch
      %12 = sbr.rel (0) target = $region9
    $region8: #{gcn_layer.1} parent=1 // pred_region
      _
    $region9: #{gcn_layer.1} parent=1 // pred_fallthru
      _
    // Predicated region
    $region10: #{gcn_layer.1} parent=1 // pred_check
      _
    $region11: #{gcn_layer.1} parent=1 // pred_check_branch
      %14 = sbr.rel (0) target = $region13
    $region12: #{gcn_layer.1} parent=1 // pred_region
      _
    $region13: #{gcn_layer.1} parent=1 // pred_fallthru
      _
    %p15 = scmp.eq.s32.totalorder 0, 0
    // Predicated region
    $region14: #{gcn_layer.1} parent=1 // pred_check
      %p16 = pneg %p15
    $region15: #{gcn_layer.1} parent=1 // pred_check_branch
      %18 = sbr.rel (%p16) target = $region17
    $region16: #{gcn_layer.1} parent=1 // pred_region
      %19 = vst [vmem:[#allocation2] sm:$0xff] 0.0
    $region17: #{gcn_layer.1} parent=1 // pred_fallthru
      _
    %v20 = vld [vmem:[#allocation2] sm:$0xff]
    %v21 = vld [vmem:[%s0] sm:$0xff]
    %v22 = vld [vmem:[%s1] sm:$0xff]
    %v23 = vld [vmem:[%s1 + $0x8] sm:$0xff]
    %v24 = vld [vmem:[%s1 + $0x10] sm:$0xff]
    %v25 = vld [vmem:[%s1 + $0x18] sm:$0xff]
    %v26 = vld [vmem:[%s1 + $0x20] sm:$0xff]
    %v27 = vld [vmem:[%s1 + $0x28] sm:$0xff]
    %v28 = vld [vmem:[%s1 + $0x30] sm:$0xff]
    %v29 = vld [vmem:[%s1 + $0x38] sm:$0xff]
    %v30 = vld [vmem:[%s1 + $0x40] sm:$0xff]
    %v31 = vld [vmem:[%s1 + $0x48] sm:$0xff]
    %v32 = vld [vmem:[%s1 + $0x50] sm:$0xff]
    %v33 = vld [vmem:[%s1 + $0x58] sm:$0xff]
    %v34 = vld [vmem:[%s1 + $0x60] sm:$0xff]
    %v35 = vld [vmem:[%s1 + $0x68] sm:$0xff]
    %v36 = vld [vmem:[%s1 + $0x70] sm:$0xff]
    %v37 = vld [vmem:[%s1 + $0x78] sm:$0xff]
    %38 = vmatprep.subr.mxu0 0.0
    %39 = vmatpush1.msra.mxu0 %v22
    %40 = vmatprep.subr.mxu0 0.0
    %41 = vmatpush1.msra.mxu0 %v23
    %42 = vmatprep.subr.mxu0 0.0
    %43 = vmatpush1.msra.mxu0 %v24
    %44 = vmatprep.subr.mxu0 0.0
    %45 = vmatpush1.msra.mxu0 %v25
    %46 = vmatprep.subr.mxu0 0.0
    %47 = vmatpush1.msra.mxu0 %v26
    %48 = vmatprep.subr.mxu0 0.0
    %49 = vmatpush1.msra.mxu0 %v27
    %50 = vmatprep.subr.mxu0 0.0
    %51 = vmatpush1.msra.mxu0 %v28
    %52 = vmatprep.subr.mxu0 0.0
    %53 = vmatpush1.msra.mxu0 %v29
    %54 = vmatprep.subr.mxu0 0.0
    %55 = vmatpush1.msra.mxu0 %v30
    %56 = vmatprep.subr.mxu0 0.0
    %57 = vmatpush1.msra.mxu0 %v31
    %58 = vmatprep.subr.mxu0 0.0
    %59 = vmatpush1.msra.mxu0 %v32
    %60 = vmatprep.subr.mxu0 0.0
    %61 = vmatpush1.msra.mxu0 %v33
    %62 = vmatprep.subr.mxu0 0.0
    %63 = vmatpush1.msra.mxu0 %v34
    %64 = vmatprep.subr.mxu0 0.0
    %65 = vmatpush1.msra.mxu0 %v35
    %66 = vmatprep.subr.mxu0 0.0
    %67 = vmatpush1.msra.mxu0 %v36
    %68 = vmatprep.subr.mxu0 0.0
    %69 = vmatpush1.msra.mxu0 %v37
    %70 = vmatprep.subr.mxu0 0.0
    %71 = vmatpush1.msra.mxu0 0.0
    %72 = vmatprep.subr.mxu0 0.0
    %73 = vmatpush1.msra.mxu0 0.0
    %74 = vmatprep.subr.mxu0 0.0
    %75 = vmatpush1.msra.mxu0 0.0
    %76 = vmatprep.subr.mxu0 0.0
    %77 = vmatpush1.msra.mxu0 0.0
    %78 = vmatprep.subr.mxu0 0.0
    %79 = vmatpush1.msra.mxu0 0.0
    %80 = vmatprep.subr.mxu0 0.0
    %81 = vmatpush1.msra.mxu0 0.0
    %82 = vmatprep.subr.mxu0 0.0
    %83 = vmatpush1.msra.mxu0 0.0
    %84 = vmatprep.subr.mxu0 0.0
    %85 = vmatpush1.msra.mxu0 0.0
    %86 = vmatprep.subr.mxu0 0.0
    %87 = vmatpush1.msra.mxu0 0.0
    %88 = vmatprep.subr.mxu0 0.0
    %89 = vmatpush1.msra.mxu0 0.0
    %90 = vmatprep.subr.mxu0 0.0
    %91 = vmatpush1.msra.mxu0 0.0
    %92 = vmatprep.subr.mxu0 0.0
    %93 = vmatpush1.msra.mxu0 0.0
    %94 = vmatprep.subr.mxu0 0.0
    %95 = vmatpush1.msra.mxu0 0.0
    %96 = vmatprep.subr.mxu0 0.0
    %97 = vmatpush1.msra.mxu0 0.0
    %98 = vmatprep.subr.mxu0 0.0
    %99 = vmatpush1.msra.mxu0 0.0
    %100 = vmatprep.subr.mxu0 0.0
    %101 = vmatpush1.msra.mxu0 0.0
    %102 = vmatprep.mubr.f32.mxu0 0.0
    %103 = vmatmul.mubr.f32.gmra.mrb[0].mxu0 %v21
    %v104 = vpop.f32.mrb[0].mxu0
    %v105 = vadd.f32 0.0, %v104
    %v106 = vpop.f32.mrb[0].mxu0
    %107 = vdwg.mxu0
    %v108 = vadd.f32 %v20, %v105
    %109 = vst [vmem:[#allocation2] sm:$0xff] %v108
    // Predicated region
    $region18: #{gcn_layer.1} parent=1 // pred_check
      %p110 = pneg %p15
    $region19: #{gcn_layer.1} parent=1 // pred_check_branch
      %112 = sbr.rel (%p110) target = $region21
    $region20: #{gcn_layer.1} parent=1 // pred_region
      %v113 = vld [vmem:[%s2] sm:$0xff]
      %v114 = vld [vmem:[#allocation2] sm:$0xff]
      %116 = vset.pattern.permute.xlu0 0
      %117 = vperm.xlu0 %116, %v113
      %v118 = vpop.permute.xlu0 %117
      %v120 = vmul.f32 %v118, %v114
      %121 = vst [vmem:[#allocation3] sm:$0xff] %v120
    $region21: #{gcn_layer.1} parent=1 // pred_fallthru
      _
    // Predicated region
    $region22: #{gcn_layer.1} parent=1 // pred_check
      _
    $region23: #{gcn_layer.1} parent=1 // pred_check_branch
      %123 = sbr.rel (0) target = $region25
    $region24: #{gcn_layer.1} parent=1 // pred_region
      %s125 = ssub.s32 128, 128
      %126 = vsyncadd [#allocation4], %s125
      %s128 = sshll.u32 [#allocation3], 4
      %s129 = int_to_ptr.vmem [resolvable:$true] %s128
      %131 = dma.vmem_to_hbm [thread:$0]  %s129, 128, %s3, [#allocation4]
    $region25: #{gcn_layer.1} parent=1 // pred_fallthru
      _
    // Predicated region
    $region26: #{gcn_layer.1} parent=1 // pred_check
      _
    $region27: #{gcn_layer.1} parent=1 // pred_check_branch
      %133 = sbr.rel (0) target = $region29
    $region28: #{gcn_layer.1} parent=1 // pred_region
      %134 = dma.done [#allocation4], 128
    $region29: #{gcn_layer.1} parent=1 // pred_fallthru
      _
    %135 = vsyncpa [#allocation4], 1

</llo_original>
